<compile_context>
chip_gen: v6e
topology: v6e:2x2x1
jax: 0.10.0
libtpu: 0.0.40
codegen_flags: <defaults>
</compile_context>

<pallas_src>
import functools

import jax
import jax.numpy as jnp
from jax import lax
from jax.experimental import pallas as pl
from jax.experimental.pallas import tpu as pltpu

_MiB = 1 << 20


# -----------------------------------------------------------------------------
# Kernels
# -----------------------------------------------------------------------------
def _tiled_kernel_f32out(scale_ref, a_ref, b_ref, o_ref, *, bf16_operands):
    """One (tm, tn) output tile; accumulates A @ B^T directly into the
    VMEM-resident f32 output block across the contraction grid axis (axis 3).

    a_ref: (tm, tk)  rows of the first half of `data`
    b_ref: (tn, tk)  rows of the second half of `data` (transpose folded into
                     the dot_general contraction -> MXU-friendly A @ B^T)
    o_ref: (tm, tn)  f32; doubles as the accumulator (same block for every k).
    """
    k = pl.program_id(3)

    a = a_ref[...]
    b = b_ref[...]
    if bf16_operands:
        a = a.astype(jnp.bfloat16)
        b = b.astype(jnp.bfloat16)
        prec = None
    else:
        prec = lax.Precision.HIGHEST  # near-exact f32 (multi-pass, slower)

    part = lax.dot_general(
        a, b,
        dimension_numbers=(((1,), (1,)), ((), ())),
        preferred_element_type=jnp.float32,
        precision=prec,
    )

    @pl.when(k == 0)
    def _():
        o_ref[...] = jnp.zeros_like(o_ref)

    o_ref[...] += part

    @pl.when(k == pl.num_programs(3) - 1)
    def _():
        # Scale applied in the epilogue (hidden under MXU/DMA slack); NOT
        # hoisted to the wrapper (that would be a separate un-hidden XLA pass).
        o_ref[...] = o_ref[...] * scale_ref[0]


def _tiled_kernel_generic(scale_ref, a_ref, b_ref, o_ref, acc_ref, *,
                          bf16_operands):
    """Same as above but with an f32 scratch accumulator, used only when the
    output dtype is narrower than f32."""
    k = pl.program_id(3)

    @pl.when(k == 0)
    def _():
        acc_ref[...] = jnp.zeros_like(acc_ref)

    a = a_ref[...]
    b = b_ref[...]
    if bf16_operands:
        a = a.astype(jnp.bfloat16)
        b = b.astype(jnp.bfloat16)
        prec = None
    else:
        prec = lax.Precision.HIGHEST

    acc_ref[...] += lax.dot_general(
        a, b,
        dimension_numbers=(((1,), (1,)), ((), ())),
        preferred_element_type=jnp.float32,
        precision=prec,
    )

    @pl.when(k == pl.num_programs(3) - 1)
    def _():
        o_ref[...] = (scale_ref[0] * acc_ref[...]).astype(o_ref.dtype)


def _batched_kernel(scale_ref, a_ref, b_ref, o_ref):
    """Fallback for small / non-aligned shapes: several batches per grid step.

    a_ref, b_ref: (bt, dim1, half); o_ref: (bt, dim1, dim1).
    Tiny shapes -> keep near-exact f32 (HIGHEST) for fidelity.
    """
    acc = jnp.einsum(
        "bmk,bnk->bmn", a_ref[...], b_ref[...],
        preferred_element_type=jnp.float32,
        precision=lax.Precision.HIGHEST,
    )
    o_ref[...] = (scale_ref[0] * acc).astype(o_ref.dtype)


# -----------------------------------------------------------------------------
# Wrapper
# -----------------------------------------------------------------------------
def _pick_tile(dim, candidates, align):
    for t in candidates:
        if t <= dim and dim % t == 0 and t % align == 0:
            return t
    return None


def _largest_divisor_leq(n, cap):
    for d in range(min(n, cap), 0, -1):
        if n % d == 0:
            return d
    return 1


def matrix_multiplication_model(data, scale, *, bf16_operands=True):
    """Pallas equivalent of MatrixMultiplicationModel.forward.

    data : (dim1, dim2) or (batch, dim1, dim2)
    scale: (1,) float32 parameter (torch.ones(1) analogue)
    bf16_operands: use bf16 MXU operands with f32 accumulation on the tiled
      path (recommended; f32 operands at default precision are not exact
      either). Set False for near-exact f32 (multi-pass, slower).
    """
    squeeze_batch = False
    if data.ndim == 2:
        data = data[None]
        squeeze_batch = True
    elif data.ndim != 3:
        raise ValueError("Unsupported tensor shape")

    batch, dim1, dim2 = data.shape
    if dim2 % 2 != 0:
        raise ValueError("dim2 must be even (the PyTorch reference requires it too)")
    half = dim2 // 2
    itemsize = jnp.dtype(data.dtype).itemsize
    out_dtype = data.dtype

    # Tile selection (largest candidates; square-ish tm/tn minimizes HBM
    # re-reads for this memory-bound problem). (8,128) rule respected.
    tm = _pick_tile(dim1, (512, 256, 128, 64, 32, 16, 8), 8)
    tn = _pick_tile(dim1, (512, 256, 128), 128)
    tk = _pick_tile(half, (1024, 512, 256, 128), 128)

    if tm is not None and tn is not None and tk is not None:
        # ---------------- Tiled path ----------------
        # Guarantee >= 2 parallel blocks so both v7x TensorCores get work
        # (batch-1 inputs would otherwise produce a (1,1,1,K) grid).
        while batch * (dim1 // tm) * (dim1 // tn) < 2:
            if tm >= 16:
                tm //= 2
            elif tn >= 256:
                tn //= 2
            else:
                break

        k_off = half // tk  # block offset of the second half along dim2
        grid = (batch, dim1 // tm, dim1 // tn, half // tk)

        # Double-buffered working set; set an explicit scoped-VMEM limit with
        # headroom (v5e default is 16 MiB; cap well under v7x's 64 MiB VMEM).
        ws = 2 * (tm * tk + tn * tk + tm * tn) * itemsize
        vmem_limit = min(48 * _MiB, int(1.5 * ws) + 4 * _MiB)

        cost = pl.CostEstimate(
            flops=2 * batch * dim1 * dim1 * half,
            transcendentals=0,
            bytes_accessed=(batch * dim1 * half * (dim1 // tn)   # A-half re-reads
                            + batch * dim1 * half * (dim1 // tm)  # B-half re-reads
                            + batch * dim1 * dim1) * itemsize,    # output
        )

        if jnp.dtype(out_dtype) == jnp.dtype(jnp.float32):
            kernel = functools.partial(_tiled_kernel_f32out,
                                       bf16_operands=bf16_operands)
            scratch = []
        else:
            kernel = functools.partial(_tiled_kernel_generic,
                                       bf16_operands=bf16_operands)
            scratch = [pltpu.VMEM((tm, tn), jnp.float32)]

        out = pl.pallas_call(
            kernel,
            out_shape=jax.ShapeDtypeStruct((batch, dim1, dim1), out_dtype),
            grid=grid,
            in_specs=[
                pl.BlockSpec(memory_space=pltpu.MemorySpace.SMEM),            # scale
                pl.BlockSpec((None, tm, tk), lambda b, i, j, k: (b, i, k)),   # A half
                pl.BlockSpec((None, tn, tk),
                             lambda b, i, j, k: (b, j, k + k_off)),           # B half
            ],
            out_specs=pl.BlockSpec((None, tm, tn), lambda b, i, j, k: (b, i, j)),
            scratch_shapes=scratch,
            compiler_params=pltpu.CompilerParams(
                dimension_semantics=("parallel", "parallel", "parallel",
                                     "arbitrary"),
                vmem_limit_bytes=vmem_limit),
            cost_estimate=cost,
        )(scale, data, data)
    else:
        # ---------------- Fallback path (small / non-aligned shapes) --------
        # Process as many batch entries per grid step as an ~8 MiB
        # double-buffered working set allows.
        bytes_per_b = (2 * dim1 * half + dim1 * dim1) * itemsize
        bt_cap = max(1, (8 * _MiB) // (2 * bytes_per_b))
        bt = _largest_divisor_leq(batch, min(batch, bt_cap))
        vmem_limit = min(48 * _MiB, 2 * bt * bytes_per_b + 4 * _MiB)

        a = data[:, :, :half]
        bh = data[:, :, half:]

        cost = pl.CostEstimate(
            flops=2 * batch * dim1 * dim1 * half,
            transcendentals=0,
            bytes_accessed=(batch * dim1 * dim2 + batch * dim1 * dim1) * itemsize,
        )

        out = pl.pallas_call(
            _batched_kernel,
            out_shape=jax.ShapeDtypeStruct((batch, dim1, dim1), out_dtype),
            grid=(batch // bt,),
            in_specs=[
                pl.BlockSpec(memory_space=pltpu.MemorySpace.SMEM),      # scale
                pl.BlockSpec((bt, dim1, half), lambda b: (b, 0, 0)),    # A
                pl.BlockSpec((bt, dim1, half), lambda b: (b, 0, 0)),    # B half
            ],
            out_specs=pl.BlockSpec((bt, dim1, dim1), lambda b: (b, 0, 0)),
            compiler_params=pltpu.CompilerParams(
                dimension_semantics=("parallel",),
                vmem_limit_bytes=vmem_limit),
            cost_estimate=cost,
        )(scale, a, bh)

    if squeeze_batch:
        out = out[0]
    return out


if __name__ == "__main__":
    key = jax.random.PRNGKey(0)
    k1, k2, k3, k4 = jax.random.split(key, 4)

    # Deterministic parameter init, matching nn.Parameter(torch.ones(1)).
    scale = jnp.ones((1,), dtype=jnp.float32)

    def reference(data, scale, *, bf16_operands):
        half = data.shape[-1] // 2
        A = data[..., :half]
        B = data[..., half:]
        if bf16_operands:
            A = A.astype(jnp.bfloat16)
            B = B.astype(jnp.bfloat16)
        out = jnp.matmul(A, jnp.swapaxes(B, -1, -2),
                         preferred_element_type=jnp.float32,
                         precision=lax.Precision.HIGHEST)
        return (scale[0] * out).astype(data.dtype)

    # 1) Small 3-D case (fallback path, whole batch in a single grid step).
    d3 = jax.random.normal(k1, (2, 16, 32), dtype=jnp.float32)
    o3 = jax.block_until_ready(matrix_multiplication_model(d3, scale))
    assert o3.shape == (2, 16, 16)
    assert jnp.allclose(o3, reference(d3, scale, bf16_operands=False),
                        atol=1e-4, rtol=1e-4)

    # 2) Small 2-D case (fallback path).
    d2 = jax.random.normal(k2, (16, 32), dtype=jnp.float32)
    o2 = jax.block_until_ready(matrix_multiplication_model(d2, scale))
    assert o2.shape == (16, 16)
    assert jnp.allclose(o2, reference(d2, scale, bf16_operands=False),
                        atol=1e-4, rtol=1e-4)

    # 3) Aligned 3-D case (tiled path; half=2048 -> two k-steps, exercises the
    #    in-place accumulation and the index_map half-split).
    d_big = jax.random.normal(k3, (2, 256, 4096), dtype=jnp.float32)
    o_big = jax.block_until_ready(matrix_multiplication_model(d_big, scale))
    assert o_big.shape == (2, 256, 256)
    assert jnp.allclose(o_big, reference(d_big, scale, bf16_operands=True),
                        atol=1e-2, rtol=1e-2)

    # 4) Aligned batch-1 case (tiled path; exercises the >=2-parallel-block
    #    split that feeds both v7x TensorCores).
    d_b1 = jax.random.normal(k4, (1, 256, 2048), dtype=jnp.float32)
    o_b1 = jax.block_until_ready(matrix_multiplication_model(d_b1, scale))
    assert o_b1.shape == (1, 256, 256)
    assert jnp.allclose(o_b1, reference(d_b1, scale, bf16_operands=True),
                        atol=1e-2, rtol=1e-2)

    print("KERNEL_OK")
</pallas_src>

<mosaic_0001>
module attributes {stable_mosaic.version = 11 : i64} {
  func.func @_batched_kernel(%arg0: i32, %arg1: memref<1xf32, #tpu.memory_space<smem>>, %arg2: memref<2x16x16xf32, #tpu.memory_space<vmem>>, %arg3: memref<2x16x16xf32, #tpu.memory_space<vmem>>, %arg4: memref<2x16x16xf32, #tpu.memory_space<vmem>>) attributes {dimension_semantics = [#tpu.dimension_semantics<parallel>], iteration_bounds = array<i64: 1>, scalar_prefetch = 0 : i64, scratch_operands = 0 : i64, tpu.core_type = #tpu.core_type<tc>, window_params = [{transform_indices = @transform_0, window_bounds = array<i64: 1>}, {transform_indices = @transform_1, window_bounds = array<i64: 2, 16, 16>}, {transform_indices = @transform_2, window_bounds = array<i64: 2, 16, 16>}, {transform_indices = @transform_3, window_bounds = array<i64: 2, 16, 16>}]} {
    %c0 = arith.constant 0 : index
    %c0_0 = arith.constant 0 : index
    %c0_1 = arith.constant 0 : index
    %0 = vector.load %arg2[%c0, %c0_0, %c0_1] : memref<2x16x16xf32, #tpu.memory_space<vmem>>, vector<2x16x16xf32>
    %c0_2 = arith.constant 0 : index
    %c0_3 = arith.constant 0 : index
    %c0_4 = arith.constant 0 : index
    %1 = vector.load %arg3[%c0_2, %c0_3, %c0_4] : memref<2x16x16xf32, #tpu.memory_space<vmem>>, vector<2x16x16xf32>
    "tpu.trace_start"() <{level = 10 : i32, message = "bmk,bnk->bmn"}> : () -> ()
    %cst = arith.constant dense<0.000000e+00> : vector<2x16x16xf32>
    %2 = tpu.matmul %0, %1, %cst {dimension_numbers = #tpu.dot_dimension_numbers<[2], [2], [1], [1], [0, 0, 0, 1, 1, 1], [0], [0]>, precision = #tpu.contract_precision<fp32>} : vector<2x16x16xf32>, vector<2x16x16xf32>, vector<2x16x16xf32> -> vector<2x16x16xf32>
    "tpu.trace_stop"() : () -> ()
    %c0_5 = arith.constant 0 : index
    %3 = memref.load %arg1[%c0_5] : memref<1xf32, #tpu.memory_space<smem>>
    %4 = vector.broadcast %3 : f32 to vector<2x16x16xf32>
    %5 = arith.mulf %4, %2 : vector<2x16x16xf32>
    %c0_6 = arith.constant 0 : index
    %c0_7 = arith.constant 0 : index
    %c0_8 = arith.constant 0 : index
    %6 = vector.load %arg4[%c0_6, %c0_7, %c0_8] : memref<2x16x16xf32, #tpu.memory_space<vmem>>, vector<2x16x16xf32>
    tpu.vector_store %arg4[%c0_6, %c0_7, %c0_8], %5 {strides = array<i32>} : memref<2x16x16xf32, #tpu.memory_space<vmem>>, vector<2x16x16xf32>,
    return
  }
  func.func @transform_0(%arg0: i32) -> i32 {
    %c0_i32 = arith.constant 0 : i32
    %c0_i32_0 = arith.constant 0 : i32
    return %c0_i32 : i32
  }
  func.func @transform_1(%arg0: i32) -> (i32, i32, i32) {
    %c0_i32 = arith.constant 0 : i32
    %c0_i32_0 = arith.constant 0 : i32
    %c0_i32_1 = arith.constant 0 : i32
    return %arg0, %c0_i32, %c0_i32_0 : i32, i32, i32
  }
  func.func @transform_2(%arg0: i32) -> (i32, i32, i32) {
    %c0_i32 = arith.constant 0 : i32
    %c0_i32_0 = arith.constant 0 : i32
    %c0_i32_1 = arith.constant 0 : i32
    return %arg0, %c0_i32, %c0_i32_0 : i32, i32, i32
  }
  func.func @transform_3(%arg0: i32) -> (i32, i32, i32) {
    %c0_i32 = arith.constant 0 : i32
    %c0_i32_0 = arith.constant 0 : i32
    %c0_i32_1 = arith.constant 0 : i32
    return %arg0, %c0_i32, %c0_i32_0 : i32, i32, i32
  }
}

</mosaic_0001>

<llo_original>
// kernel: tpu_custom_call.1
$region0: #{tpu_custom_call.1}
  #allocation0 [shape = 'u32[]', space=smem, size = 0x4, offset = 0x4, fixed_abs, tag = 'smem constant byte address 0x4 - core index']
  #allocation1 [shape = 'u32[144,128]{1,0:T(1,128)}', space=vmem, size = 0x12000, scoped, tag = 'internal scratch']
  #allocation2 [shape = 'f32[1]{0:T(128)S(6)}', space=smem, size = 0x200, scoped, tag = 'scoped memory for tpu_custom_call.1']
  %s0 = inlined_call_operand.<no memory space> [shape: f32[1], index: 0, kind: input, shape index: {}]
  %s1 = inlined_call_operand.hbm [shape: f32[2,16,16], index: 1, kind: input, shape index: {}]
  %s2 = inlined_call_operand.hbm [shape: f32[2,16,16], index: 2, kind: input, shape index: {}]
  %s3 = inlined_call_operand.hbm [shape: f32[2,16,16], index: 3, kind: output, shape index: {}]
  %s4 = sld [smem:[#allocation0]]
  $region30: #{tpu_custom_call.1} parent=0
    _
  %s6 = ssub.s32 1, %s4
  %s7 = scalar_select 0, %s6, %s4
  %8 = sst [smem:[#allocation2]] %s0
  $region1: #{tpu_custom_call.1} parent=0
    #allocation3 [shape = 'u8[16384]{0}', space=vmem, size = 0x4000, scoped, tag = 'input window, operand 1, single buffered']
    #allocation4 [shape = 's32[1]{0}', space=sflag, size = 0x4, scoped, tag = 'scoped memory for tpu_custom_call.1']
    #allocation5 [shape = 's32[1]{0}', space=sflag, size = 0x4, scoped, tag = 'scoped memory for tpu_custom_call.1']
    #allocation6 [shape = 'u8[16384]{0}', space=vmem, size = 0x4000, scoped, tag = 'input window, operand 2, single buffered']
    #allocation7 [shape = 's32[1]{0}', space=sflag, size = 0x4, scoped, tag = 'scoped memory for tpu_custom_call.1']
    #allocation8 [shape = 'u8[16384]{0}', space=vmem, size = 0x4000, scoped, tag = 'output window, operand 0, single buffered']
    %9 = vsyncpa [#allocation4], 0
    %10 = vsyncpa [#allocation7], 0
    %11 = vsyncpa [#allocation5], 0
    // Predicated region
    $region2: #{tpu_custom_call.1} parent=1 // pred_check
      _
    $region3: #{tpu_custom_call.1} parent=1 // pred_check_branch
      %13 = sbr.rel (0) target = $region5
    $region4: #{tpu_custom_call.1} parent=1 // pred_region
      _
    $region5: #{tpu_custom_call.1} parent=1 // pred_fallthru
      _
    // Predicated region
    $region6: #{tpu_custom_call.1} parent=1 // pred_check
      _
    $region7: #{tpu_custom_call.1} parent=1 // pred_check_branch
      %15 = sbr.rel (0) target = $region9
    $region8: #{tpu_custom_call.1} parent=1 // pred_region
      %s17 = ssub.s32 512, 512
      %18 = vsyncadd [#allocation4], %s17
      %s19 = sshll.u32 [#allocation3], 4
      %s20 = int_to_ptr.vmem [resolvable:$true] %s19
      %25 = dma.hbm_to_vmem [thread:$0]  %s1, 512, %s20, [#allocation4], 128, 128, 8
    $region9: #{tpu_custom_call.1} parent=1 // pred_fallthru
      _
    // Predicated region
    $region10: #{tpu_custom_call.1} parent=1 // pred_check
      _
    $region11: #{tpu_custom_call.1} parent=1 // pred_check_branch
      %27 = sbr.rel (0) target = $region13
    $region12: #{tpu_custom_call.1} parent=1 // pred_region
      %s29 = ssub.s32 512, 512
      %30 = vsyncadd [#allocation7], %s29
      %s31 = sshll.u32 [#allocation6], 4
      %s32 = int_to_ptr.vmem [resolvable:$true] %s31
      %37 = dma.hbm_to_vmem [thread:$0]  %s2, 512, %s32, [#allocation7], 128, 128, 8
    $region13: #{tpu_custom_call.1} parent=1 // pred_fallthru
      _
    // Predicated region
    $region14: #{tpu_custom_call.1} parent=1 // pred_check
      _
    $region15: #{tpu_custom_call.1} parent=1 // pred_check_branch
      %39 = sbr.rel (0) target = $region17
    $region16: #{tpu_custom_call.1} parent=1 // pred_region
      %40 = dma.done [#allocation4], 512
    $region17: #{tpu_custom_call.1} parent=1 // pred_fallthru
      _
    // Predicated region
    $region18: #{tpu_custom_call.1} parent=1 // pred_check
      _
    $region19: #{tpu_custom_call.1} parent=1 // pred_check_branch
      %42 = sbr.rel (0) target = $region21
    $region20: #{tpu_custom_call.1} parent=1 // pred_region
      %43 = dma.done [#allocation7], 512
    $region21: #{tpu_custom_call.1} parent=1 // pred_fallthru
      _
    %v44 = vld [vmem:[#allocation3] sm:$0xff]
    %v45 = vld [vmem:[#allocation3 + $0x8] sm:$0xff]
    %v46 = vld [vmem:[#allocation3 + $0x10] sm:$0xff]
    %v47 = vld [vmem:[#allocation3 + $0x18] sm:$0xff]
    %v48 = vld [vmem:[#allocation6] sm:$0xff]
    %v49 = vld [vmem:[#allocation6 + $0x8] sm:$0xff]
    %v50 = vld [vmem:[#allocation6 + $0x10] sm:$0xff]
    %v51 = vld [vmem:[#allocation6 + $0x18] sm:$0xff]
    %vm52 = vcmask 130048
    %v54 = vsel %vm52, %v44, 0
    %v57 = vsel %vm52, %v45, 0
    %v60 = vsel %vm52, %v48, 0
    %v63 = vsel %vm52, %v49, 0
    %65 = vmatprep.subr.mxu0 0.0
    %66 = vmatpush1.xpose.msra.mxu0 0.0
    %67 = vmatprep.subr.mxu0 0.0
    %68 = vmatpush1.xpose.msra.mxu0 0.0
    %69 = vmatprep.subr.mxu0 0.0
    %70 = vmatpush1.xpose.msra.mxu0 0.0
    %71 = vmatprep.subr.mxu0 0.0
    %72 = vmatpush1.xpose.msra.mxu0 0.0
    %73 = vmatprep.subr.mxu0 0.0
    %74 = vmatpush1.xpose.msra.mxu0 0.0
    %75 = vmatprep.subr.mxu0 0.0
    %76 = vmatpush1.xpose.msra.mxu0 0.0
    %77 = vmatprep.subr.mxu0 0.0
    %78 = vmatpush1.xpose.msra.mxu0 0.0
    %79 = vmatprep.subr.mxu0 0.0
    %80 = vmatpush1.xpose.msra.mxu0 0.0
    %81 = vmatprep.subr.mxu0 0.0
    %82 = vmatpush1.xpose.msra.mxu0 0.0
    %83 = vmatprep.subr.mxu0 0.0
    %84 = vmatpush1.xpose.msra.mxu0 0.0
    %85 = vmatprep.subr.mxu0 0.0
    %86 = vmatpush1.xpose.msra.mxu0 0.0
    %87 = vmatprep.subr.mxu0 0.0
    %88 = vmatpush1.xpose.msra.mxu0 0.0
    %89 = vmatprep.subr.mxu0 0.0
    %90 = vmatpush1.xpose.msra.mxu0 0.0
    %91 = vmatprep.subr.mxu0 0.0
    %92 = vmatpush1.xpose.msra.mxu0 0.0
    %93 = vmatprep.subr.mxu0 0.0
    %v94 = vand.u32 %v63, 4294901760
    %95 = vmatpush1.xpose.msra.mxu0 %v94
    %96 = vmatprep.subr.mxu0 0.0
    %v97 = vand.u32 %v60, 4294901760
    %98 = vmatpush1.xpose.msra.mxu0 %v97
    %99 = vmatprep.subr.mxu0 0.0
    %100 = vmatpush2.xpose.msra.mxu0 0.0
    %101 = vmatprep.subr.mxu0 0.0
    %102 = vmatpush2.xpose.msra.mxu0 0.0
    %103 = vmatprep.subr.mxu0 0.0
    %104 = vmatpush2.xpose.msra.mxu0 0.0
    %105 = vmatprep.subr.mxu0 0.0
    %106 = vmatpush2.xpose.msra.mxu0 0.0
    %107 = vmatprep.subr.mxu0 0.0
    %108 = vmatpush2.xpose.msra.mxu0 0.0
    %109 = vmatprep.subr.mxu0 0.0
    %110 = vmatpush2.xpose.msra.mxu0 0.0
    %111 = vmatprep.subr.mxu0 0.0
    %112 = vmatpush2.xpose.msra.mxu0 0.0
    %113 = vmatprep.subr.mxu0 0.0
    %114 = vmatpush2.xpose.msra.mxu0 0.0
    %115 = vmatprep.subr.mxu0 0.0
    %116 = vmatpush2.xpose.msra.mxu0 0.0
    %117 = vmatprep.subr.mxu0 0.0
    %118 = vmatpush2.xpose.msra.mxu0 0.0
    %119 = vmatprep.subr.mxu0 0.0
    %120 = vmatpush2.xpose.msra.mxu0 0.0
    %121 = vmatprep.subr.mxu0 0.0
    %122 = vmatpush2.xpose.msra.mxu0 0.0
    %123 = vmatprep.subr.mxu0 0.0
    %124 = vmatpush2.xpose.msra.mxu0 0.0
    %125 = vmatprep.subr.mxu0 0.0
    %126 = vmatpush2.xpose.msra.mxu0 0.0
    %127 = vmatprep.subr.mxu0 0.0
    %128 = vmatpush2.xpose.msra.mxu0 0.0
    %129 = vmatprep.subr.mxu0 0.0
    %130 = vmatpush2.xpose.msra.mxu0 0.0
    %131 = vmatprep.mubr.f32.mxu0 0.0
    %v132 = vand.u32 %v54, 4294901760
    %v133 = vsub.f32 %v54, %v132
    %v134 = vand.u32 %v133, 4294901760
    %v135 = vsub.f32 %v133, %v134
    %v136 = vand.u32 %v135, 4294901760
    %137 = vmatmul.mubr.f32.gmra.mxu0 %v136
    %v138 = vpop.f32.mrf.mxu0
    %v139 = vadd.f32 0.0, %v138
    %v140 = vpop.f32.mrf.mxu0
    %141 = vmatprep.mubr.f32.mxu0 0.0
    %v142 = vand.u32 %v57, 4294901760
    %v143 = vsub.f32 %v57, %v142
    %v144 = vand.u32 %v143, 4294901760
    %v145 = vsub.f32 %v143, %v144
    %v146 = vand.u32 %v145, 4294901760
    %147 = vmatmul.mubr.f32.gmra.mxu0 %v146
    %v148 = vpop.f32.mrf.mxu0
    %v149 = vadd.f32 0.0, %v148
    %v150 = vpop.f32.mrf.mxu0
    %151 = vdwg.mxu0
    %152 = vmatprep.subr.mxu0 0.0
    %153 = vmatpush1.xpose.msra.mxu0 0.0
    %154 = vmatprep.subr.mxu0 0.0
    %155 = vmatpush1.xpose.msra.mxu0 0.0
    %156 = vmatprep.subr.mxu0 0.0
    %157 = vmatpush1.xpose.msra.mxu0 0.0
    %158 = vmatprep.subr.mxu0 0.0
    %159 = vmatpush1.xpose.msra.mxu0 0.0
    %160 = vmatprep.subr.mxu0 0.0
    %161 = vmatpush1.xpose.msra.mxu0 0.0
    %162 = vmatprep.subr.mxu0 0.0
    %163 = vmatpush1.xpose.msra.mxu0 0.0
    %164 = vmatprep.subr.mxu0 0.0
    %165 = vmatpush1.xpose.msra.mxu0 0.0
    %166 = vmatprep.subr.mxu0 0.0
    %167 = vmatpush1.xpose.msra.mxu0 0.0
    %168 = vmatprep.subr.mxu0 0.0
    %169 = vmatpush1.xpose.msra.mxu0 0.0
    %170 = vmatprep.subr.mxu0 0.0
    %171 = vmatpush1.xpose.msra.mxu0 0.0
    %172 = vmatprep.subr.mxu0 0.0
    %173 = vmatpush1.xpose.msra.mxu0 0.0
    %174 = vmatprep.subr.mxu0 0.0
    %175 = vmatpush1.xpose.msra.mxu0 0.0
    %176 = vmatprep.subr.mxu0 0.0
    %177 = vmatpush1.xpose.msra.mxu0 0.0
    %178 = vmatprep.subr.mxu0 0.0
    %179 = vmatpush1.xpose.msra.mxu0 0.0
    %180 = vmatprep.subr.mxu0 0.0
    %v181 = vand.u32 %v63, 4294901760
    %v182 = vsub.f32 %v63, %v181
    %v183 = vand.u32 %v182, 4294901760
    %v184 = vsub.f32 %v182, %v183
    %v185 = vand.u32 %v184, 4294901760
    %186 = vmatpush1.xpose.msra.mxu0 %v185
    %187 = vmatprep.subr.mxu0 0.0
    %v188 = vand.u32 %v60, 4294901760
    %v189 = vsub.f32 %v60, %v188
    %v190 = vand.u32 %v189, 4294901760
    %v191 = vsub.f32 %v189, %v190
    %v192 = vand.u32 %v191, 4294901760
    %193 = vmatpush1.xpose.msra.mxu0 %v192
    %194 = vmatprep.subr.mxu0 0.0
    %195 = vmatpush2.xpose.msra.mxu0 0.0
    %196 = vmatprep.subr.mxu0 0.0
    %197 = vmatpush2.xpose.msra.mxu0 0.0
    %198 = vmatprep.subr.mxu0 0.0
    %199 = vmatpush2.xpose.msra.mxu0 0.0
    %200 = vmatprep.subr.mxu0 0.0
    %201 = vmatpush2.xpose.msra.mxu0 0.0
    %202 = vmatprep.subr.mxu0 0.0
    %203 = vmatpush2.xpose.msra.mxu0 0.0
    %204 = vmatprep.subr.mxu0 0.0
    %205 = vmatpush2.xpose.msra.mxu0 0.0
    %206 = vmatprep.subr.mxu0 0.0
    %207 = vmatpush2.xpose.msra.mxu0 0.0
    %208 = vmatprep.subr.mxu0 0.0
    %209 = vmatpush2.xpose.msra.mxu0 0.0
    %210 = vmatprep.subr.mxu0 0.0
    %211 = vmatpush2.xpose.msra.mxu0 0.0
    %212 = vmatprep.subr.mxu0 0.0
    %213 = vmatpush2.xpose.msra.mxu0 0.0
    %214 = vmatprep.subr.mxu0 0.0
    %215 = vmatpush2.xpose.msra.mxu0 0.0
    %216 = vmatprep.subr.mxu0 0.0
    %217 = vmatpush2.xpose.msra.mxu0 0.0
    %218 = vmatprep.subr.mxu0 0.0
    %219 = vmatpush2.xpose.msra.mxu0 0.0
    %220 = vmatprep.subr.mxu0 0.0
    %221 = vmatpush2.xpose.msra.mxu0 0.0
    %222 = vmatprep.subr.mxu0 0.0
    %223 = vmatpush2.xpose.msra.mxu0 0.0
    %224 = vmatprep.subr.mxu0 0.0
    %225 = vmatpush2.xpose.msra.mxu0 0.0
    %226 = vmatprep.mubr.f32.mxu0 0.0
    %v227 = vand.u32 %v54, 4294901760
    %228 = vmatmul.mubr.f32.gmra.mxu0 %v227
    %v229 = vpop.f32.mrf.mxu0
    %v230 = vadd.f32 %v139, %v229
    %v231 = vpop.f32.mrf.mxu0
    %232 = vmatprep.mubr.f32.mxu0 0.0
    %v233 = vand.u32 %v57, 4294901760
    %234 = vmatmul.mubr.f32.gmra.mxu0 %v233
    %v235 = vpop.f32.mrf.mxu0
    %v236 = vadd.f32 %v149, %v235
    %v237 = vpop.f32.mrf.mxu0
    %238 = vdwg.mxu0
    %239 = vmatprep.subr.mxu0 0.0
    %240 = vmatpush1.xpose.msra.mxu0 0.0
    %241 = vmatprep.subr.mxu0 0.0
    %242 = vmatpush1.xpose.msra.mxu0 0.0
    %243 = vmatprep.subr.mxu0 0.0
    %244 = vmatpush1.xpose.msra.mxu0 0.0
    %245 = vmatprep.subr.mxu0 0.0
    %246 = vmatpush1.xpose.msra.mxu0 0.0
    %247 = vmatprep.subr.mxu0 0.0
    %248 = vmatpush1.xpose.msra.mxu0 0.0
    %249 = vmatprep.subr.mxu0 0.0
    %250 = vmatpush1.xpose.msra.mxu0 0.0
    %251 = vmatprep.subr.mxu0 0.0
    %252 = vmatpush1.xpose.msra.mxu0 0.0
    %253 = vmatprep.subr.mxu0 0.0
    %254 = vmatpush1.xpose.msra.mxu0 0.0
    %255 = vmatprep.subr.mxu0 0.0
    %256 = vmatpush1.xpose.msra.mxu0 0.0
    %257 = vmatprep.subr.mxu0 0.0
    %258 = vmatpush1.xpose.msra.mxu0 0.0
    %259 = vmatprep.subr.mxu0 0.0
    %260 = vmatpush1.xpose.msra.mxu0 0.0
    %261 = vmatprep.subr.mxu0 0.0
    %262 = vmatpush1.xpose.msra.mxu0 0.0
    %263 = vmatprep.subr.mxu0 0.0
    %264 = vmatpush1.xpose.msra.mxu0 0.0
    %265 = vmatprep.subr.mxu0 0.0
    %266 = vmatpush1.xpose.msra.mxu0 0.0
    %267 = vmatprep.subr.mxu0 0.0
    %v268 = vand.u32 %v63, 4294901760
    %v269 = vsub.f32 %v63, %v268
    %270 = vmatpush1.xpose.msra.mxu0 %v269
    %271 = vmatprep.subr.mxu0 0.0
    %v272 = vand.u32 %v60, 4294901760
    %v273 = vsub.f32 %v60, %v272
    %274 = vmatpush1.xpose.msra.mxu0 %v273
    %275 = vmatprep.subr.mxu0 0.0
    %276 = vmatpush2.xpose.msra.mxu0 0.0
    %277 = vmatprep.subr.mxu0 0.0
    %278 = vmatpush2.xpose.msra.mxu0 0.0
    %279 = vmatprep.subr.mxu0 0.0
    %280 = vmatpush2.xpose.msra.mxu0 0.0
    %281 = vmatprep.subr.mxu0 0.0
    %282 = vmatpush2.xpose.msra.mxu0 0.0
    %283 = vmatprep.subr.mxu0 0.0
    %284 = vmatpush2.xpose.msra.mxu0 0.0
    %285 = vmatprep.subr.mxu0 0.0
    %286 = vmatpush2.xpose.msra.mxu0 0.0
    %287 = vmatprep.subr.mxu0 0.0
    %288 = vmatpush2.xpose.msra.mxu0 0.0
    %289 = vmatprep.subr.mxu0 0.0
    %290 = vmatpush2.xpose.msra.mxu0 0.0
    %291 = vmatprep.subr.mxu0 0.0
    %292 = vmatpush2.xpose.msra.mxu0 0.0
    %293 = vmatprep.subr.mxu0 0.0
    %294 = vmatpush2.xpose.msra.mxu0 0.0
    %295 = vmatprep.subr.mxu0 0.0
    %296 = vmatpush2.xpose.msra.mxu0 0.0
    %297 = vmatprep.subr.mxu0 0.0
    %298 = vmatpush2.xpose.msra.mxu0 0.0
    %299 = vmatprep.subr.mxu0 0.0
    %300 = vmatpush2.xpose.msra.mxu0 0.0
    %301 = vmatprep.subr.mxu0 0.0
    %302 = vmatpush2.xpose.msra.mxu0 0.0
    %303 = vmatprep.subr.mxu0 0.0
    %304 = vmatpush2.xpose.msra.mxu0 0.0
    %305 = vmatprep.subr.mxu0 0.0
    %306 = vmatpush2.xpose.msra.mxu0 0.0
    %307 = vmatprep.mubr.f32.mxu0 0.0
    %v308 = vand.u32 %v54, 4294901760
    %v309 = vsub.f32 %v54, %v308
    %310 = vmatmul.mubr.f32.gmra.mxu0 %v309
    %v311 = vpop.f32.mrf.mxu0
    %v312 = vadd.f32 %v230, %v311
    %v313 = vpop.f32.mrf.mxu0
    %314 = vmatprep.mubr.f32.mxu0 0.0
    %v315 = vand.u32 %v57, 4294901760
    %v316 = vsub.f32 %v57, %v315
    %317 = vmatmul.mubr.f32.gmra.mxu0 %v316
    %v318 = vpop.f32.mrf.mxu0
    %v319 = vadd.f32 %v236, %v318
    %v320 = vpop.f32.mrf.mxu0
    %321 = vdwg.mxu0
    %322 = vmatprep.subr.mxu0 0.0
    %323 = vmatpush1.xpose.msra.mxu0 0.0
    %324 = vmatprep.subr.mxu0 0.0
    %325 = vmatpush1.xpose.msra.mxu0 0.0
    %326 = vmatprep.subr.mxu0 0.0
    %327 = vmatpush1.xpose.msra.mxu0 0.0
    %328 = vmatprep.subr.mxu0 0.0
    %329 = vmatpush1.xpose.msra.mxu0 0.0
    %330 = vmatprep.subr.mxu0 0.0
    %331 = vmatpush1.xpose.msra.mxu0 0.0
    %332 = vmatprep.subr.mxu0 0.0
    %333 = vmatpush1.xpose.msra.mxu0 0.0
    %334 = vmatprep.subr.mxu0 0.0
    %335 = vmatpush1.xpose.msra.mxu0 0.0
    %336 = vmatprep.subr.mxu0 0.0
    %337 = vmatpush1.xpose.msra.mxu0 0.0
    %338 = vmatprep.subr.mxu0 0.0
    %339 = vmatpush1.xpose.msra.mxu0 0.0
    %340 = vmatprep.subr.mxu0 0.0
    %341 = vmatpush1.xpose.msra.mxu0 0.0
    %342 = vmatprep.subr.mxu0 0.0
    %343 = vmatpush1.xpose.msra.mxu0 0.0
    %344 = vmatprep.subr.mxu0 0.0
    %345 = vmatpush1.xpose.msra.mxu0 0.0
    %346 = vmatprep.subr.mxu0 0.0
    %347 = vmatpush1.xpose.msra.mxu0 0.0
    %348 = vmatprep.subr.mxu0 0.0
    %349 = vmatpush1.xpose.msra.mxu0 0.0
    %350 = vmatprep.subr.mxu0 0.0
    %v351 = vand.u32 %v63, 4294901760
    %352 = vmatpush1.xpose.msra.mxu0 %v351
    %353 = vmatprep.subr.mxu0 0.0
    %v354 = vand.u32 %v60, 4294901760
    %355 = vmatpush1.xpose.msra.mxu0 %v354
    %356 = vmatprep.subr.mxu0 0.0
    %357 = vmatpush2.xpose.msra.mxu0 0.0
    %358 = vmatprep.subr.mxu0 0.0
    %359 = vmatpush2.xpose.msra.mxu0 0.0
    %360 = vmatprep.subr.mxu0 0.0
    %361 = vmatpush2.xpose.msra.mxu0 0.0
    %362 = vmatprep.subr.mxu0 0.0
    %363 = vmatpush2.xpose.msra.mxu0 0.0
    %364 = vmatprep.subr.mxu0 0.0
    %365 = vmatpush2.xpose.msra.mxu0 0.0
    %366 = vmatprep.subr.mxu0 0.0
    %367 = vmatpush2.xpose.msra.mxu0 0.0
    %368 = vmatprep.subr.mxu0 0.0
    %369 = vmatpush2.xpose.msra.mxu0 0.0
    %370 = vmatprep.subr.mxu0 0.0
    %371 = vmatpush2.xpose.msra.mxu0 0.0
    %372 = vmatprep.subr.mxu0 0.0
    %373 = vmatpush2.xpose.msra.mxu0 0.0
    %374 = vmatprep.subr.mxu0 0.0
    %375 = vmatpush2.xpose.msra.mxu0 0.0
    %376 = vmatprep.subr.mxu0 0.0
    %377 = vmatpush2.xpose.msra.mxu0 0.0
    %378 = vmatprep.subr.mxu0 0.0
    %379 = vmatpush2.xpose.msra.mxu0 0.0
    %380 = vmatprep.subr.mxu0 0.0
    %381 = vmatpush2.xpose.msra.mxu0 0.0
    %382 = vmatprep.subr.mxu0 0.0
    %383 = vmatpush2.xpose.msra.mxu0 0.0
    %384 = vmatprep.subr.mxu0 0.0
    %385 = vmatpush2.xpose.msra.mxu0 0.0
    %386 = vmatprep.subr.mxu0 0.0
    %387 = vmatpush2.xpose.msra.mxu0 0.0
    %388 = vmatprep.mubr.f32.mxu0 0.0
    %v389 = vand.u32 %v54, 4294901760
    %v390 = vsub.f32 %v54, %v389
    %v391 = vand.u32 %v390, 4294901760
    %392 = vmatmul.mubr.f32.gmra.mxu0 %v391
    %v393 = vpop.f32.mrf.mxu0
    %v394 = vadd.f32 %v312, %v393
    %v395 = vpop.f32.mrf.mxu0
    %396 = vmatprep.mubr.f32.mxu0 0.0
    %v397 = vand.u32 %v57, 4294901760
    %v398 = vsub.f32 %v57, %v397
    %v399 = vand.u32 %v398, 4294901760
    %400 = vmatmul.mubr.f32.gmra.mxu0 %v399
    %v401 = vpop.f32.mrf.mxu0
    %v402 = vadd.f32 %v319, %v401
    %v403 = vpop.f32.mrf.mxu0
    %404 = vdwg.mxu0
    %405 = vmatprep.subr.mxu0 0.0
    %406 = vmatpush1.xpose.msra.mxu0 0.0
    %407 = vmatprep.subr.mxu0 0.0
    %408 = vmatpush1.xpose.msra.mxu0 0.0
    %409 = vmatprep.subr.mxu0 0.0
    %410 = vmatpush1.xpose.msra.mxu0 0.0
    %411 = vmatprep.subr.mxu0 0.0
    %412 = vmatpush1.xpose.msra.mxu0 0.0
    %413 = vmatprep.subr.mxu0 0.0
    %414 = vmatpush1.xpose.msra.mxu0 0.0
    %415 = vmatprep.subr.mxu0 0.0
    %416 = vmatpush1.xpose.msra.mxu0 0.0
    %417 = vmatprep.subr.mxu0 0.0
    %418 = vmatpush1.xpose.msra.mxu0 0.0
    %419 = vmatprep.subr.mxu0 0.0
    %420 = vmatpush1.xpose.msra.mxu0 0.0
    %421 = vmatprep.subr.mxu0 0.0
    %422 = vmatpush1.xpose.msra.mxu0 0.0
    %423 = vmatprep.subr.mxu0 0.0
    %424 = vmatpush1.xpose.msra.mxu0 0.0
    %425 = vmatprep.subr.mxu0 0.0
    %426 = vmatpush1.xpose.msra.mxu0 0.0
    %427 = vmatprep.subr.mxu0 0.0
    %428 = vmatpush1.xpose.msra.mxu0 0.0
    %429 = vmatprep.subr.mxu0 0.0
    %430 = vmatpush1.xpose.msra.mxu0 0.0
    %431 = vmatprep.subr.mxu0 0.0
    %432 = vmatpush1.xpose.msra.mxu0 0.0
    %433 = vmatprep.subr.mxu0 0.0
    %v434 = vand.u32 %v63, 4294901760
    %v435 = vsub.f32 %v63, %v434
    %v436 = vand.u32 %v435, 4294901760
    %437 = vmatpush1.xpose.msra.mxu0 %v436
    %438 = vmatprep.subr.mxu0 0.0
    %v439 = vand.u32 %v60, 4294901760
    %v440 = vsub.f32 %v60, %v439
    %v441 = vand.u32 %v440, 4294901760
    %442 = vmatpush1.xpose.msra.mxu0 %v441
    %443 = vmatprep.subr.mxu0 0.0
    %444 = vmatpush2.xpose.msra.mxu0 0.0
    %445 = vmatprep.subr.mxu0 0.0
    %446 = vmatpush2.xpose.msra.mxu0 0.0
    %447 = vmatprep.subr.mxu0 0.0
    %448 = vmatpush2.xpose.msra.mxu0 0.0
    %449 = vmatprep.subr.mxu0 0.0
    %450 = vmatpush2.xpose.msra.mxu0 0.0
    %451 = vmatprep.subr.mxu0 0.0
    %452 = vmatpush2.xpose.msra.mxu0 0.0
    %453 = vmatprep.subr.mxu0 0.0
    %454 = vmatpush2.xpose.msra.mxu0 0.0
    %455 = vmatprep.subr.mxu0 0.0
    %456 = vmatpush2.xpose.msra.mxu0 0.0
    %457 = vmatprep.subr.mxu0 0.0
    %458 = vmatpush2.xpose.msra.mxu0 0.0
    %459 = vmatprep.subr.mxu0 0.0
    %460 = vmatpush2.xpose.msra.mxu0 0.0
    %461 = vmatprep.subr.mxu0 0.0
    %462 = vmatpush2.xpose.msra.mxu0 0.0
    %463 = vmatprep.subr.mxu0 0.0
    %464 = vmatpush2.xpose.msra.mxu0 0.0
    %465 = vmatprep.subr.mxu0 0.0
    %466 = vmatpush2.xpose.msra.mxu0 0.0
    %467 = vmatprep.subr.mxu0 0.0
    %468 = vmatpush2.xpose.msra.mxu0 0.0
    %469 = vmatprep.subr.mxu0 0.0
    %470 = vmatpush2.xpose.msra.mxu0 0.0
    %471 = vmatprep.subr.mxu0 0.0
    %472 = vmatpush2.xpose.msra.mxu0 0.0
    %473 = vmatprep.subr.mxu0 0.0
    %474 = vmatpush2.xpose.msra.mxu0 0.0
    %475 = vmatprep.mubr.f32.mxu0 0.0
    %v476 = vand.u32 %v54, 4294901760
    %477 = vmatmul.mubr.f32.gmra.mxu0 %v476
    %v478 = vpop.f32.mrf.mxu0
    %v479 = vadd.f32 %v394, %v478
    %v480 = vpop.f32.mrf.mxu0
    %481 = vmatprep.mubr.f32.mxu0 0.0
    %v482 = vand.u32 %v57, 4294901760
    %483 = vmatmul.mubr.f32.gmra.mxu0 %v482
    %v484 = vpop.f32.mrf.mxu0
    %v485 = vadd.f32 %v402, %v484
    %v486 = vpop.f32.mrf.mxu0
    %487 = vdwg.mxu0
    %488 = vmatprep.subr.mxu0 0.0
    %489 = vmatpush1.xpose.msra.mxu0 0.0
    %490 = vmatprep.subr.mxu0 0.0
    %491 = vmatpush1.xpose.msra.mxu0 0.0
    %492 = vmatprep.subr.mxu0 0.0
    %493 = vmatpush1.xpose.msra.mxu0 0.0
    %494 = vmatprep.subr.mxu0 0.0
    %495 = vmatpush1.xpose.msra.mxu0 0.0
    %496 = vmatprep.subr.mxu0 0.0
    %497 = vmatpush1.xpose.msra.mxu0 0.0
    %498 = vmatprep.subr.mxu0 0.0
    %499 = vmatpush1.xpose.msra.mxu0 0.0
    %500 = vmatprep.subr.mxu0 0.0
    %501 = vmatpush1.xpose.msra.mxu0 0.0
    %502 = vmatprep.subr.mxu0 0.0
    %503 = vmatpush1.xpose.msra.mxu0 0.0
    %504 = vmatprep.subr.mxu0 0.0
    %505 = vmatpush1.xpose.msra.mxu0 0.0
    %506 = vmatprep.subr.mxu0 0.0
    %507 = vmatpush1.xpose.msra.mxu0 0.0
    %508 = vmatprep.subr.mxu0 0.0
    %509 = vmatpush1.xpose.msra.mxu0 0.0
    %510 = vmatprep.subr.mxu0 0.0
    %511 = vmatpush1.xpose.msra.mxu0 0.0
    %512 = vmatprep.subr.mxu0 0.0
    %513 = vmatpush1.xpose.msra.mxu0 0.0
    %514 = vmatprep.subr.mxu0 0.0
    %515 = vmatpush1.xpose.msra.mxu0 0.0
    %516 = vmatprep.subr.mxu0 0.0
    %v517 = vand.u32 %v63, 4294901760
    %518 = vmatpush1.xpose.msra.mxu0 %v517
    %519 = vmatprep.subr.mxu0 0.0
    %v520 = vand.u32 %v60, 4294901760
    %521 = vmatpush1.xpose.msra.mxu0 %v520
    %522 = vmatprep.subr.mxu0 0.0
    %523 = vmatpush2.xpose.msra.mxu0 0.0
    %524 = vmatprep.subr.mxu0 0.0
    %525 = vmatpush2.xpose.msra.mxu0 0.0
    %526 = vmatprep.subr.mxu0 0.0
    %527 = vmatpush2.xpose.msra.mxu0 0.0
    %528 = vmatprep.subr.mxu0 0.0
    %529 = vmatpush2.xpose.msra.mxu0 0.0
    %530 = vmatprep.subr.mxu0 0.0
    %531 = vmatpush2.xpose.msra.mxu0 0.0
    %532 = vmatprep.subr.mxu0 0.0
    %533 = vmatpush2.xpose.msra.mxu0 0.0
    %534 = vmatprep.subr.mxu0 0.0
    %535 = vmatpush2.xpose.msra.mxu0 0.0
    %536 = vmatprep.subr.mxu0 0.0
    %537 = vmatpush2.xpose.msra.mxu0 0.0
    %538 = vmatprep.subr.mxu0 0.0
    %539 = vmatpush2.xpose.msra.mxu0 0.0
    %540 = vmatprep.subr.mxu0 0.0
    %541 = vmatpush2.xpose.msra.mxu0 0.0
    %542 = vmatprep.subr.mxu0 0.0
    %543 = vmatpush2.xpose.msra.mxu0 0.0
    %544 = vmatprep.subr.mxu0 0.0
    %545 = vmatpush2.xpose.msra.mxu0 0.0
    %546 = vmatprep.subr.mxu0 0.0
    %547 = vmatpush2.xpose.msra.mxu0 0.0
    %548 = vmatprep.subr.mxu0 0.0
    %549 = vmatpush2.xpose.msra.mxu0 0.0
    %550 = vmatprep.subr.mxu0 0.0
    %551 = vmatpush2.xpose.msra.mxu0 0.0
    %552 = vmatprep.subr.mxu0 0.0
    %553 = vmatpush2.xpose.msra.mxu0 0.0
    %554 = vmatprep.mubr.f32.mxu0 0.0
    %v555 = vand.u32 %v54, 4294901760
    %556 = vmatmul.mubr.f32.gmra.mxu0 %v555
    %v557 = vpop.f32.mrf.mxu0
    %v558 = vadd.f32 %v479, %v557
    %v559 = vpop.f32.mrf.mxu0
    %560 = vmatprep.mubr.f32.mxu0 0.0
    %v561 = vand.u32 %v57, 4294901760
    %562 = vmatmul.mubr.f32.gmra.mxu0 %v561
    %v563 = vpop.f32.mrf.mxu0
    %v564 = vadd.f32 %v485, %v563
    %v565 = vpop.f32.mrf.mxu0
    %566 = vdwg.mxu0
    %v568 = vsel %vm52, %v46, 0
    %v571 = vsel %vm52, %v47, 0
    %v574 = vsel %vm52, %v50, 0
    %v577 = vsel %vm52, %v51, 0
    %579 = vmatprep.subr.mxu0 0.0
    %580 = vmatpush1.xpose.msra.mxu0 0.0
    %581 = vmatprep.subr.mxu0 0.0
    %582 = vmatpush1.xpose.msra.mxu0 0.0
    %583 = vmatprep.subr.mxu0 0.0
    %584 = vmatpush1.xpose.msra.mxu0 0.0
    %585 = vmatprep.subr.mxu0 0.0
    %586 = vmatpush1.xpose.msra.mxu0 0.0
    %587 = vmatprep.subr.mxu0 0.0
    %588 = vmatpush1.xpose.msra.mxu0 0.0
    %589 = vmatprep.subr.mxu0 0.0
    %590 = vmatpush1.xpose.msra.mxu0 0.0
    %591 = vmatprep.subr.mxu0 0.0
    %592 = vmatpush1.xpose.msra.mxu0 0.0
    %593 = vmatprep.subr.mxu0 0.0
    %594 = vmatpush1.xpose.msra.mxu0 0.0
    %595 = vmatprep.subr.mxu0 0.0
    %596 = vmatpush1.xpose.msra.mxu0 0.0
    %597 = vmatprep.subr.mxu0 0.0
    %598 = vmatpush1.xpose.msra.mxu0 0.0
    %599 = vmatprep.subr.mxu0 0.0
    %600 = vmatpush1.xpose.msra.mxu0 0.0
    %601 = vmatprep.subr.mxu0 0.0
    %602 = vmatpush1.xpose.msra.mxu0 0.0
    %603 = vmatprep.subr.mxu0 0.0
    %604 = vmatpush1.xpose.msra.mxu0 0.0
    %605 = vmatprep.subr.mxu0 0.0
    %606 = vmatpush1.xpose.msra.mxu0 0.0
    %607 = vmatprep.subr.mxu0 0.0
    %v608 = vand.u32 %v577, 4294901760
    %609 = vmatpush1.xpose.msra.mxu0 %v608
    %610 = vmatprep.subr.mxu0 0.0
    %v611 = vand.u32 %v574, 4294901760
    %612 = vmatpush1.xpose.msra.mxu0 %v611
    %613 = vmatprep.subr.mxu0 0.0
    %614 = vmatpush2.xpose.msra.mxu0 0.0
    %615 = vmatprep.subr.mxu0 0.0
    %616 = vmatpush2.xpose.msra.mxu0 0.0
    %617 = vmatprep.subr.mxu0 0.0
    %618 = vmatpush2.xpose.msra.mxu0 0.0
    %619 = vmatprep.subr.mxu0 0.0
    %620 = vmatpush2.xpose.msra.mxu0 0.0
    %621 = vmatprep.subr.mxu0 0.0
    %622 = vmatpush2.xpose.msra.mxu0 0.0
    %623 = vmatprep.subr.mxu0 0.0
    %624 = vmatpush2.xpose.msra.mxu0 0.0
    %625 = vmatprep.subr.mxu0 0.0
    %626 = vmatpush2.xpose.msra.mxu0 0.0
    %627 = vmatprep.subr.mxu0 0.0
    %628 = vmatpush2.xpose.msra.mxu0 0.0
    %629 = vmatprep.subr.mxu0 0.0
    %630 = vmatpush2.xpose.msra.mxu0 0.0
    %631 = vmatprep.subr.mxu0 0.0
    %632 = vmatpush2.xpose.msra.mxu0 0.0
    %633 = vmatprep.subr.mxu0 0.0
    %634 = vmatpush2.xpose.msra.mxu0 0.0
    %635 = vmatprep.subr.mxu0 0.0
    %636 = vmatpush2.xpose.msra.mxu0 0.0
    %637 = vmatprep.subr.mxu0 0.0
    %638 = vmatpush2.xpose.msra.mxu0 0.0
    %639 = vmatprep.subr.mxu0 0.0
    %640 = vmatpush2.xpose.msra.mxu0 0.0
    %641 = vmatprep.subr.mxu0 0.0
    %642 = vmatpush2.xpose.msra.mxu0 0.0
    %643 = vmatprep.subr.mxu0 0.0
    %644 = vmatpush2.xpose.msra.mxu0 0.0
    %645 = vmatprep.mubr.f32.mxu0 0.0
    %v646 = vand.u32 %v568, 4294901760
    %v647 = vsub.f32 %v568, %v646
    %v648 = vand.u32 %v647, 4294901760
    %v649 = vsub.f32 %v647, %v648
    %v650 = vand.u32 %v649, 4294901760
    %651 = vmatmul.mubr.f32.gmra.mxu0 %v650
    %v652 = vpop.f32.mrf.mxu0
    %v653 = vadd.f32 0.0, %v652
    %v654 = vpop.f32.mrf.mxu0
    %655 = vmatprep.mubr.f32.mxu0 0.0
    %v656 = vand.u32 %v571, 4294901760
    %v657 = vsub.f32 %v571, %v656
    %v658 = vand.u32 %v657, 4294901760
    %v659 = vsub.f32 %v657, %v658
    %v660 = vand.u32 %v659, 4294901760
    %661 = vmatmul.mubr.f32.gmra.mxu0 %v660
    %v662 = vpop.f32.mrf.mxu0
    %v663 = vadd.f32 0.0, %v662
    %v664 = vpop.f32.mrf.mxu0
    %665 = vdwg.mxu0
    %666 = vmatprep.subr.mxu0 0.0
    %667 = vmatpush1.xpose.msra.mxu0 0.0
    %668 = vmatprep.subr.mxu0 0.0
    %669 = vmatpush1.xpose.msra.mxu0 0.0
    %670 = vmatprep.subr.mxu0 0.0
    %671 = vmatpush1.xpose.msra.mxu0 0.0
    %672 = vmatprep.subr.mxu0 0.0
    %673 = vmatpush1.xpose.msra.mxu0 0.0
    %674 = vmatprep.subr.mxu0 0.0
    %675 = vmatpush1.xpose.msra.mxu0 0.0
    %676 = vmatprep.subr.mxu0 0.0
    %677 = vmatpush1.xpose.msra.mxu0 0.0
    %678 = vmatprep.subr.mxu0 0.0
    %679 = vmatpush1.xpose.msra.mxu0 0.0
    %680 = vmatprep.subr.mxu0 0.0
    %681 = vmatpush1.xpose.msra.mxu0 0.0
    %682 = vmatprep.subr.mxu0 0.0
    %683 = vmatpush1.xpose.msra.mxu0 0.0
    %684 = vmatprep.subr.mxu0 0.0
    %685 = vmatpush1.xpose.msra.mxu0 0.0
    %686 = vmatprep.subr.mxu0 0.0
    %687 = vmatpush1.xpose.msra.mxu0 0.0
    %688 = vmatprep.subr.mxu0 0.0
    %689 = vmatpush1.xpose.msra.mxu0 0.0
    %690 = vmatprep.subr.mxu0 0.0
    %691 = vmatpush1.xpose.msra.mxu0 0.0
    %692 = vmatprep.subr.mxu0 0.0
    %693 = vmatpush1.xpose.msra.mxu0 0.0
    %694 = vmatprep.subr.mxu0 0.0
    %v695 = vand.u32 %v577, 4294901760
    %v696 = vsub.f32 %v577, %v695
    %v697 = vand.u32 %v696, 4294901760
    %v698 = vsub.f32 %v696, %v697
    %v699 = vand.u32 %v698, 4294901760
    %700 = vmatpush1.xpose.msra.mxu0 %v699
    %701 = vmatprep.subr.mxu0 0.0
    %v702 = vand.u32 %v574, 4294901760
    %v703 = vsub.f32 %v574, %v702
    %v704 = vand.u32 %v703, 4294901760
    %v705 = vsub.f32 %v703, %v704
    %v706 = vand.u32 %v705, 4294901760
    %707 = vmatpush1.xpose.msra.mxu0 %v706
    %708 = vmatprep.subr.mxu0 0.0
    %709 = vmatpush2.xpose.msra.mxu0 0.0
    %710 = vmatprep.subr.mxu0 0.0
    %711 = vmatpush2.xpose.msra.mxu0 0.0
    %712 = vmatprep.subr.mxu0 0.0
    %713 = vmatpush2.xpose.msra.mxu0 0.0
    %714 = vmatprep.subr.mxu0 0.0
    %715 = vmatpush2.xpose.msra.mxu0 0.0
    %716 = vmatprep.subr.mxu0 0.0
    %717 = vmatpush2.xpose.msra.mxu0 0.0
    %718 = vmatprep.subr.mxu0 0.0
    %719 = vmatpush2.xpose.msra.mxu0 0.0
    %720 = vmatprep.subr.mxu0 0.0
    %721 = vmatpush2.xpose.msra.mxu0 0.0
    %722 = vmatprep.subr.mxu0 0.0
    %723 = vmatpush2.xpose.msra.mxu0 0.0
    %724 = vmatprep.subr.mxu0 0.0
    %725 = vmatpush2.xpose.msra.mxu0 0.0
    %726 = vmatprep.subr.mxu0 0.0
    %727 = vmatpush2.xpose.msra.mxu0 0.0
    %728 = vmatprep.subr.mxu0 0.0
    %729 = vmatpush2.xpose.msra.mxu0 0.0
    %730 = vmatprep.subr.mxu0 0.0
    %731 = vmatpush2.xpose.msra.mxu0 0.0
    %732 = vmatprep.subr.mxu0 0.0
    %733 = vmatpush2.xpose.msra.mxu0 0.0
    %734 = vmatprep.subr.mxu0 0.0
    %735 = vmatpush2.xpose.msra.mxu0 0.0
    %736 = vmatprep.subr.mxu0 0.0
    %737 = vmatpush2.xpose.msra.mxu0 0.0
    %738 = vmatprep.subr.mxu0 0.0
    %739 = vmatpush2.xpose.msra.mxu0 0.0
    %740 = vmatprep.mubr.f32.mxu0 0.0
    %v741 = vand.u32 %v568, 4294901760
    %742 = vmatmul.mubr.f32.gmra.mxu0 %v741
    %v743 = vpop.f32.mrf.mxu0
    %v744 = vadd.f32 %v653, %v743
    %v745 = vpop.f32.mrf.mxu0
    %746 = vmatprep.mubr.f32.mxu0 0.0
    %v747 = vand.u32 %v571, 4294901760
    %748 = vmatmul.mubr.f32.gmra.mxu0 %v747
    %v749 = vpop.f32.mrf.mxu0
    %v750 = vadd.f32 %v663, %v749
    %v751 = vpop.f32.mrf.mxu0
    %752 = vdwg.mxu0
    %753 = vmatprep.subr.mxu0 0.0
    %754 = vmatpush1.xpose.msra.mxu0 0.0
    %755 = vmatprep.subr.mxu0 0.0
    %756 = vmatpush1.xpose.msra.mxu0 0.0
    %757 = vmatprep.subr.mxu0 0.0
    %758 = vmatpush1.xpose.msra.mxu0 0.0
    %759 = vmatprep.subr.mxu0 0.0
    %760 = vmatpush1.xpose.msra.mxu0 0.0
    %761 = vmatprep.subr.mxu0 0.0
    %762 = vmatpush1.xpose.msra.mxu0 0.0
    %763 = vmatprep.subr.mxu0 0.0
    %764 = vmatpush1.xpose.msra.mxu0 0.0
    %765 = vmatprep.subr.mxu0 0.0
    %766 = vmatpush1.xpose.msra.mxu0 0.0
    %767 = vmatprep.subr.mxu0 0.0
    %768 = vmatpush1.xpose.msra.mxu0 0.0
    %769 = vmatprep.subr.mxu0 0.0
    %770 = vmatpush1.xpose.msra.mxu0 0.0
    %771 = vmatprep.subr.mxu0 0.0
    %772 = vmatpush1.xpose.msra.mxu0 0.0
    %773 = vmatprep.subr.mxu0 0.0
    %774 = vmatpush1.xpose.msra.mxu0 0.0
    %775 = vmatprep.subr.mxu0 0.0
    %776 = vmatpush1.xpose.msra.mxu0 0.0
    %777 = vmatprep.subr.mxu0 0.0
    %778 = vmatpush1.xpose.msra.mxu0 0.0
    %779 = vmatprep.subr.mxu0 0.0
    %780 = vmatpush1.xpose.msra.mxu0 0.0
    %781 = vmatprep.subr.mxu0 0.0
    %v782 = vand.u32 %v577, 4294901760
    %v783 = vsub.f32 %v577, %v782
    %784 = vmatpush1.xpose.msra.mxu0 %v783
    %785 = vmatprep.subr.mxu0 0.0
    %v786 = vand.u32 %v574, 4294901760
    %v787 = vsub.f32 %v574, %v786
    %788 = vmatpush1.xpose.msra.mxu0 %v787
    %789 = vmatprep.subr.mxu0 0.0
    %790 = vmatpush2.xpose.msra.mxu0 0.0
    %791 = vmatprep.subr.mxu0 0.0
    %792 = vmatpush2.xpose.msra.mxu0 0.0
    %793 = vmatprep.subr.mxu0 0.0
    %794 = vmatpush2.xpose.msra.mxu0 0.0
    %795 = vmatprep.subr.mxu0 0.0
    %796 = vmatpush2.xpose.msra.mxu0 0.0
    %797 = vmatprep.subr.mxu0 0.0
    %798 = vmatpush2.xpose.msra.mxu0 0.0
    %799 = vmatprep.subr.mxu0 0.0
    %800 = vmatpush2.xpose.msra.mxu0 0.0
    %801 = vmatprep.subr.mxu0 0.0
    %802 = vmatpush2.xpose.msra.mxu0 0.0
    %803 = vmatprep.subr.mxu0 0.0
    %804 = vmatpush2.xpose.msra.mxu0 0.0
    %805 = vmatprep.subr.mxu0 0.0
    %806 = vmatpush2.xpose.msra.mxu0 0.0
    %807 = vmatprep.subr.mxu0 0.0
    %808 = vmatpush2.xpose.msra.mxu0 0.0
    %809 = vmatprep.subr.mxu0 0.0
    %810 = vmatpush2.xpose.msra.mxu0 0.0
    %811 = vmatprep.subr.mxu0 0.0
    %812 = vmatpush2.xpose.msra.mxu0 0.0
    %813 = vmatprep.subr.mxu0 0.0
    %814 = vmatpush2.xpose.msra.mxu0 0.0
    %815 = vmatprep.subr.mxu0 0.0
    %816 = vmatpush2.xpose.msra.mxu0 0.0
    %817 = vmatprep.subr.mxu0 0.0
    %818 = vmatpush2.xpose.msra.mxu0 0.0
    %819 = vmatprep.subr.mxu0 0.0
    %820 = vmatpush2.xpose.msra.mxu0 0.0
    %821 = vmatprep.mubr.f32.mxu0 0.0
    %v822 = vand.u32 %v568, 4294901760
    %v823 = vsub.f32 %v568, %v822
    %824 = vmatmul.mubr.f32.gmra.mxu0 %v823
    %v825 = vpop.f32.mrf.mxu0
    %v826 = vadd.f32 %v744, %v825
    %v827 = vpop.f32.mrf.mxu0
    %828 = vmatprep.mubr.f32.mxu0 0.0
    %v829 = vand.u32 %v571, 4294901760
    %v830 = vsub.f32 %v571, %v829
    %831 = vmatmul.mubr.f32.gmra.mxu0 %v830
    %v832 = vpop.f32.mrf.mxu0
    %v833 = vadd.f32 %v750, %v832
    %v834 = vpop.f32.mrf.mxu0
    %835 = vdwg.mxu0
    %836 = vmatprep.subr.mxu0 0.0
    %837 = vmatpush1.xpose.msra.mxu0 0.0
    %838 = vmatprep.subr.mxu0 0.0
    %839 = vmatpush1.xpose.msra.mxu0 0.0
    %840 = vmatprep.subr.mxu0 0.0
    %841 = vmatpush1.xpose.msra.mxu0 0.0
    %842 = vmatprep.subr.mxu0 0.0
    %843 = vmatpush1.xpose.msra.mxu0 0.0
    %844 = vmatprep.subr.mxu0 0.0
    %845 = vmatpush1.xpose.msra.mxu0 0.0
    %846 = vmatprep.subr.mxu0 0.0
    %847 = vmatpush1.xpose.msra.mxu0 0.0
    %848 = vmatprep.subr.mxu0 0.0
    %849 = vmatpush1.xpose.msra.mxu0 0.0
    %850 = vmatprep.subr.mxu0 0.0
    %851 = vmatpush1.xpose.msra.mxu0 0.0
    %852 = vmatprep.subr.mxu0 0.0
    %853 = vmatpush1.xpose.msra.mxu0 0.0
    %854 = vmatprep.subr.mxu0 0.0
    %855 = vmatpush1.xpose.msra.mxu0 0.0
    %856 = vmatprep.subr.mxu0 0.0
    %857 = vmatpush1.xpose.msra.mxu0 0.0
    %858 = vmatprep.subr.mxu0 0.0
    %859 = vmatpush1.xpose.msra.mxu0 0.0
    %860 = vmatprep.subr.mxu0 0.0
    %861 = vmatpush1.xpose.msra.mxu0 0.0
    %862 = vmatprep.subr.mxu0 0.0
    %863 = vmatpush1.xpose.msra.mxu0 0.0
    %864 = vmatprep.subr.mxu0 0.0
    %v865 = vand.u32 %v577, 4294901760
    %866 = vmatpush1.xpose.msra.mxu0 %v865
    %867 = vmatprep.subr.mxu0 0.0
    %v868 = vand.u32 %v574, 4294901760
    %869 = vmatpush1.xpose.msra.mxu0 %v868
    %870 = vmatprep.subr.mxu0 0.0
    %871 = vmatpush2.xpose.msra.mxu0 0.0
    %872 = vmatprep.subr.mxu0 0.0
    %873 = vmatpush2.xpose.msra.mxu0 0.0
    %874 = vmatprep.subr.mxu0 0.0
    %875 = vmatpush2.xpose.msra.mxu0 0.0
    %876 = vmatprep.subr.mxu0 0.0
    %877 = vmatpush2.xpose.msra.mxu0 0.0
    %878 = vmatprep.subr.mxu0 0.0
    %879 = vmatpush2.xpose.msra.mxu0 0.0
    %880 = vmatprep.subr.mxu0 0.0
    %881 = vmatpush2.xpose.msra.mxu0 0.0
    %882 = vmatprep.subr.mxu0 0.0
    %883 = vmatpush2.xpose.msra.mxu0 0.0
    %884 = vmatprep.subr.mxu0 0.0
    %885 = vmatpush2.xpose.msra.mxu0 0.0
    %886 = vmatprep.subr.mxu0 0.0
    %887 = vmatpush2.xpose.msra.mxu0 0.0
    %888 = vmatprep.subr.mxu0 0.0
    %889 = vmatpush2.xpose.msra.mxu0 0.0
    %890 = vmatprep.subr.mxu0 0.0
    %891 = vmatpush2.xpose.msra.mxu0 0.0
    %892 = vmatprep.subr.mxu0 0.0
    %893 = vmatpush2.xpose.msra.mxu0 0.0
    %894 = vmatprep.subr.mxu0 0.0
    %895 = vmatpush2.xpose.msra.mxu0 0.0
    %896 = vmatprep.subr.mxu0 0.0
    %897 = vmatpush2.xpose.msra.mxu0 0.0
    %898 = vmatprep.subr.mxu0 0.0
    %899 = vmatpush2.xpose.msra.mxu0 0.0
    %900 = vmatprep.subr.mxu0 0.0
    %901 = vmatpush2.xpose.msra.mxu0 0.0
    %902 = vmatprep.mubr.f32.mxu0 0.0
    %v903 = vand.u32 %v568, 4294901760
    %v904 = vsub.f32 %v568, %v903
    %v905 = vand.u32 %v904, 4294901760
    %906 = vmatmul.mubr.f32.gmra.mxu0 %v905
    %v907 = vpop.f32.mrf.mxu0
    %v908 = vadd.f32 %v826, %v907
    %v909 = vpop.f32.mrf.mxu0
    %910 = vmatprep.mubr.f32.mxu0 0.0
    %v911 = vand.u32 %v571, 4294901760
    %v912 = vsub.f32 %v571, %v911
    %v913 = vand.u32 %v912, 4294901760
    %914 = vmatmul.mubr.f32.gmra.mxu0 %v913
    %v915 = vpop.f32.mrf.mxu0
    %v916 = vadd.f32 %v833, %v915
    %v917 = vpop.f32.mrf.mxu0
    %918 = vdwg.mxu0
    %919 = vmatprep.subr.mxu0 0.0
    %920 = vmatpush1.xpose.msra.mxu0 0.0
    %921 = vmatprep.subr.mxu0 0.0
    %922 = vmatpush1.xpose.msra.mxu0 0.0
    %923 = vmatprep.subr.mxu0 0.0
    %924 = vmatpush1.xpose.msra.mxu0 0.0
    %925 = vmatprep.subr.mxu0 0.0
    %926 = vmatpush1.xpose.msra.mxu0 0.0
    %927 = vmatprep.subr.mxu0 0.0
    %928 = vmatpush1.xpose.msra.mxu0 0.0
    %929 = vmatprep.subr.mxu0 0.0
    %930 = vmatpush1.xpose.msra.mxu0 0.0
    %931 = vmatprep.subr.mxu0 0.0
    %932 = vmatpush1.xpose.msra.mxu0 0.0
    %933 = vmatprep.subr.mxu0 0.0
    %934 = vmatpush1.xpose.msra.mxu0 0.0
    %935 = vmatprep.subr.mxu0 0.0
    %936 = vmatpush1.xpose.msra.mxu0 0.0
    %937 = vmatprep.subr.mxu0 0.0
    %938 = vmatpush1.xpose.msra.mxu0 0.0
    %939 = vmatprep.subr.mxu0 0.0
    %940 = vmatpush1.xpose.msra.mxu0 0.0
    %941 = vmatprep.subr.mxu0 0.0
    %942 = vmatpush1.xpose.msra.mxu0 0.0
    %943 = vmatprep.subr.mxu0 0.0
    %944 = vmatpush1.xpose.msra.mxu0 0.0
    %945 = vmatprep.subr.mxu0 0.0
    %946 = vmatpush1.xpose.msra.mxu0 0.0
    %947 = vmatprep.subr.mxu0 0.0
    %v948 = vand.u32 %v577, 4294901760
    %v949 = vsub.f32 %v577, %v948
    %v950 = vand.u32 %v949, 4294901760
    %951 = vmatpush1.xpose.msra.mxu0 %v950
    %952 = vmatprep.subr.mxu0 0.0
    %v953 = vand.u32 %v574, 4294901760
    %v954 = vsub.f32 %v574, %v953
    %v955 = vand.u32 %v954, 4294901760
    %956 = vmatpush1.xpose.msra.mxu0 %v955
    %957 = vmatprep.subr.mxu0 0.0
    %958 = vmatpush2.xpose.msra.mxu0 0.0
    %959 = vmatprep.subr.mxu0 0.0
    %960 = vmatpush2.xpose.msra.mxu0 0.0
    %961 = vmatprep.subr.mxu0 0.0
    %962 = vmatpush2.xpose.msra.mxu0 0.0
    %963 = vmatprep.subr.mxu0 0.0
    %964 = vmatpush2.xpose.msra.mxu0 0.0
    %965 = vmatprep.subr.mxu0 0.0
    %966 = vmatpush2.xpose.msra.mxu0 0.0
    %967 = vmatprep.subr.mxu0 0.0
    %968 = vmatpush2.xpose.msra.mxu0 0.0
    %969 = vmatprep.subr.mxu0 0.0
    %970 = vmatpush2.xpose.msra.mxu0 0.0
    %971 = vmatprep.subr.mxu0 0.0
    %972 = vmatpush2.xpose.msra.mxu0 0.0
    %973 = vmatprep.subr.mxu0 0.0
    %974 = vmatpush2.xpose.msra.mxu0 0.0
    %975 = vmatprep.subr.mxu0 0.0
    %976 = vmatpush2.xpose.msra.mxu0 0.0
    %977 = vmatprep.subr.mxu0 0.0
    %978 = vmatpush2.xpose.msra.mxu0 0.0
    %979 = vmatprep.subr.mxu0 0.0
    %980 = vmatpush2.xpose.msra.mxu0 0.0
    %981 = vmatprep.subr.mxu0 0.0
    %982 = vmatpush2.xpose.msra.mxu0 0.0
    %983 = vmatprep.subr.mxu0 0.0
    %984 = vmatpush2.xpose.msra.mxu0 0.0
    %985 = vmatprep.subr.mxu0 0.0
    %986 = vmatpush2.xpose.msra.mxu0 0.0
    %987 = vmatprep.subr.mxu0 0.0
    %988 = vmatpush2.xpose.msra.mxu0 0.0
    %989 = vmatprep.mubr.f32.mxu0 0.0
    %v990 = vand.u32 %v568, 4294901760
    %991 = vmatmul.mubr.f32.gmra.mxu0 %v990
    %v992 = vpop.f32.mrf.mxu0
    %v993 = vadd.f32 %v908, %v992
    %v994 = vpop.f32.mrf.mxu0
    %995 = vmatprep.mubr.f32.mxu0 0.0
    %v996 = vand.u32 %v571, 4294901760
    %997 = vmatmul.mubr.f32.gmra.mxu0 %v996
    %v998 = vpop.f32.mrf.mxu0
    %v999 = vadd.f32 %v916, %v998
    %v1000 = vpop.f32.mrf.mxu0
    %1001 = vdwg.mxu0
    %1002 = vmatprep.subr.mxu0 0.0
    %1003 = vmatpush1.xpose.msra.mxu0 0.0
    %1004 = vmatprep.subr.mxu0 0.0
    %1005 = vmatpush1.xpose.msra.mxu0 0.0
    %1006 = vmatprep.subr.mxu0 0.0
    %1007 = vmatpush1.xpose.msra.mxu0 0.0
    %1008 = vmatprep.subr.mxu0 0.0
    %1009 = vmatpush1.xpose.msra.mxu0 0.0
    %1010 = vmatprep.subr.mxu0 0.0
    %1011 = vmatpush1.xpose.msra.mxu0 0.0
    %1012 = vmatprep.subr.mxu0 0.0
    %1013 = vmatpush1.xpose.msra.mxu0 0.0
    %1014 = vmatprep.subr.mxu0 0.0
    %1015 = vmatpush1.xpose.msra.mxu0 0.0
    %1016 = vmatprep.subr.mxu0 0.0
    %1017 = vmatpush1.xpose.msra.mxu0 0.0
    %1018 = vmatprep.subr.mxu0 0.0
    %1019 = vmatpush1.xpose.msra.mxu0 0.0
    %1020 = vmatprep.subr.mxu0 0.0
    %1021 = vmatpush1.xpose.msra.mxu0 0.0
    %1022 = vmatprep.subr.mxu0 0.0
    %1023 = vmatpush1.xpose.msra.mxu0 0.0
    %1024 = vmatprep.subr.mxu0 0.0
    %1025 = vmatpush1.xpose.msra.mxu0 0.0
    %1026 = vmatprep.subr.mxu0 0.0
    %1027 = vmatpush1.xpose.msra.mxu0 0.0
    %1028 = vmatprep.subr.mxu0 0.0
    %1029 = vmatpush1.xpose.msra.mxu0 0.0
    %1030 = vmatprep.subr.mxu0 0.0
    %v1031 = vand.u32 %v577, 4294901760
    %1032 = vmatpush1.xpose.msra.mxu0 %v1031
    %1033 = vmatprep.subr.mxu0 0.0
    %v1034 = vand.u32 %v574, 4294901760
    %1035 = vmatpush1.xpose.msra.mxu0 %v1034
    %1036 = vmatprep.subr.mxu0 0.0
    %1037 = vmatpush2.xpose.msra.mxu0 0.0
    %1038 = vmatprep.subr.mxu0 0.0
    %1039 = vmatpush2.xpose.msra.mxu0 0.0
    %1040 = vmatprep.subr.mxu0 0.0
    %1041 = vmatpush2.xpose.msra.mxu0 0.0
    %1042 = vmatprep.subr.mxu0 0.0
    %1043 = vmatpush2.xpose.msra.mxu0 0.0
    %1044 = vmatprep.subr.mxu0 0.0
    %1045 = vmatpush2.xpose.msra.mxu0 0.0
    %1046 = vmatprep.subr.mxu0 0.0
    %1047 = vmatpush2.xpose.msra.mxu0 0.0
    %1048 = vmatprep.subr.mxu0 0.0
    %1049 = vmatpush2.xpose.msra.mxu0 0.0
    %1050 = vmatprep.subr.mxu0 0.0
    %1051 = vmatpush2.xpose.msra.mxu0 0.0
    %1052 = vmatprep.subr.mxu0 0.0
    %1053 = vmatpush2.xpose.msra.mxu0 0.0
    %1054 = vmatprep.subr.mxu0 0.0
    %1055 = vmatpush2.xpose.msra.mxu0 0.0
    %1056 = vmatprep.subr.mxu0 0.0
    %1057 = vmatpush2.xpose.msra.mxu0 0.0
    %1058 = vmatprep.subr.mxu0 0.0
    %1059 = vmatpush2.xpose.msra.mxu0 0.0
    %1060 = vmatprep.subr.mxu0 0.0
    %1061 = vmatpush2.xpose.msra.mxu0 0.0
    %1062 = vmatprep.subr.mxu0 0.0
    %1063 = vmatpush2.xpose.msra.mxu0 0.0
    %1064 = vmatprep.subr.mxu0 0.0
    %1065 = vmatpush2.xpose.msra.mxu0 0.0
    %1066 = vmatprep.subr.mxu0 0.0
    %1067 = vmatpush2.xpose.msra.mxu0 0.0
    %1068 = vmatprep.mubr.f32.mxu0 0.0
    %v1069 = vand.u32 %v568, 4294901760
    %1070 = vmatmul.mubr.f32.gmra.mxu0 %v1069
    %v1071 = vpop.f32.mrf.mxu0
    %v1072 = vadd.f32 %v993, %v1071
    %v1073 = vpop.f32.mrf.mxu0
    %1074 = vmatprep.mubr.f32.mxu0 0.0
    %v1075 = vand.u32 %v571, 4294901760
    %1076 = vmatmul.mubr.f32.gmra.mxu0 %v1075
    %v1077 = vpop.f32.mrf.mxu0
    %v1078 = vadd.f32 %v999, %v1077
    %v1079 = vpop.f32.mrf.mxu0
    %1080 = vdwg.mxu0
    %s1081 = sld [smem:[#allocation2]]
    %v1082 = vstv %s1081
    %v1083 = vmul.f32 %v1082, %v558
    %v1084 = vmul.f32 %v1082, %v564
    %v1085 = vmul.f32 %v1082, %v1072
    %v1086 = vmul.f32 %v1082, %v1078
    %1087 = vst.msk [vmem:[#allocation8] sm:$0xff] %vm52, %v1083
    %1088 = vst.msk [vmem:[#allocation8 + $0x8] sm:$0xff] %vm52, %v1084
    %1089 = vst.msk [vmem:[#allocation8 + $0x10] sm:$0xff] %vm52, %v1085
    %1090 = vst.msk [vmem:[#allocation8 + $0x18] sm:$0xff] %vm52, %v1086
    // Predicated region
    $region22: #{tpu_custom_call.1} parent=1 // pred_check
      _
    $region23: #{tpu_custom_call.1} parent=1 // pred_check_branch
      %1092 = sbr.rel (0) target = $region25
    $region24: #{tpu_custom_call.1} parent=1 // pred_region
      %s1094 = ssub.s32 512, 512
      %1095 = vsyncadd [#allocation5], %s1094
      %s1096 = sshll.u32 [#allocation8], 4
      %s1097 = int_to_ptr.vmem [resolvable:$true] %s1096
      %1102 = dma.vmem_to_hbm [thread:$0]  %s1097, 512, %s3, [#allocation5], 128, 128, 8
    $region25: #{tpu_custom_call.1} parent=1 // pred_fallthru
      _
    // Predicated region
    $region26: #{tpu_custom_call.1} parent=1 // pred_check
      _
    $region27: #{tpu_custom_call.1} parent=1 // pred_check_branch
      %1104 = sbr.rel (0) target = $region29
    $region28: #{tpu_custom_call.1} parent=1 // pred_region
      %1105 = dma.done [#allocation5], 512
    $region29: #{tpu_custom_call.1} parent=1 // pred_fallthru
      _
    %1106 = vsyncpa [#allocation4], 1
    %1107 = vsyncpa [#allocation7], 1
    %1108 = vsyncpa [#allocation5], 1

</llo_original>
